<compile_context>
chip_gen: v6e
topology: v6e:2x2x1
jax: 0.10.0
libtpu: 0.0.40
codegen_flags: <defaults>
</compile_context>

<pallas_src>
import math
from functools import partial

import jax
import jax.numpy as jnp
from jax.experimental import pallas as pl
from jax.experimental.pallas import tpu as pltpu


# ------------------------------------------------------------------ linear ---
def _linear_kernel(x_ref, w_ref, b_ref, o_ref, *, compute_dtype):
    # x: (TILE_N, D_in); w: (D_in, TILE_DOUT) pre-transposed bf16; b: (1, TILE_DOUT) f32
    x = x_ref[...].astype(compute_dtype)           # downcast (no-op if already bf16)
    w = w_ref[...].astype(compute_dtype)
    y = jnp.dot(x, w, preferred_element_type=jnp.float32)   # bf16 MXU, f32 accum
    o_ref[...] = (y + b_ref[...]).astype(o_ref.dtype)


def pallas_linear(x, w_t, b, *, tile_n=512, tile_d_out=2048,
                  out_dtype=None, compute_dtype=jnp.bfloat16):
    """x: (N, D_in) @ w_t: (D_in, D_out) + b: (D_out,) -> (N, D_out)."""
    n, d_in = x.shape
    d_out = w_t.shape[1]
    out_dtype = out_dtype if out_dtype is not None else x.dtype
    tn = min(tile_n, n)
    td = min(tile_d_out, d_out)
    kernel = partial(_linear_kernel, compute_dtype=compute_dtype)
    return pl.pallas_call(
        kernel,
        out_shape=jax.ShapeDtypeStruct((n, d_out), out_dtype),
        grid_spec=pltpu.PrefetchScalarGridSpec(
            num_scalar_prefetch=0,
            # d_out tiles outermost: the weight block stays VMEM-resident across
            # all row tiles (no re-DMA); activations are streamed lane-dense.
            grid=(pl.cdiv(d_out, td), pl.cdiv(n, tn)),
            in_specs=[
                pl.BlockSpec((tn, d_in), lambda j, i: (i, 0)),     # streamed rows
                pl.BlockSpec((d_in, td), lambda j, i: (0, j)),     # resident bf16 weight
                pl.BlockSpec((1, td), lambda j, i: (0, j)),        # bias (f32)
            ],
            out_specs=pl.BlockSpec((tn, td), lambda j, i: (i, j)),
        ),
        compiler_params=pltpu.CompilerParams(
            dimension_semantics=("parallel", "parallel"),
            vmem_limit_bytes=48 * 1024 * 1024,
        ),
    )(x, w_t, b.reshape(1, d_out))


# --------------------------------------------------------------- attention ---
def _flash_attn_kernel(q_ref, k_ref, v_ref, *rest,
                       has_mask, kv_tile, tk_total, ragged_kv):
    if has_mask:
        mask_ref, o_ref, m_sc, l_sc, acc_sc = rest
    else:
        o_ref, m_sc, l_sc, acc_sc = rest
        mask_ref = None

    kv = pl.program_id(3)

    @pl.when(kv == 0)
    def _():
        m_sc[...] = jnp.full(m_sc.shape, -jnp.inf, dtype=m_sc.dtype)
        l_sc[...] = jnp.zeros(l_sc.shape, dtype=l_sc.dtype)
        acc_sc[...] = jnp.zeros(acc_sc.shape, dtype=acc_sc.dtype)

    # 1/sqrt(d_k) is pre-folded into the q projection; feed bf16 refs straight
    # to the MXU (no f32 upcast materialization in the inner loop).
    q = q_ref[...]                                         # (q_tile, d_k)
    k = k_ref[...]                                         # (kv_tile, d_k)
    v = v_ref[...]                                         # (kv_tile, d_k)

    # scores = q @ k^T, contracting last dims directly (no XLU transpose).
    s = jax.lax.dot_general(q, k, (((1,), (1,)), ((), ())),
                            preferred_element_type=jnp.float32)   # (q_tile, kv_tile)
    if has_mask:
        s = s + mask_ref[...].astype(jnp.float32)

    if ragged_kv:                                # static: only when Tk % kv_tile != 0
        base = kv * kv_tile
        col = base + jax.lax.broadcasted_iota(jnp.int32, s.shape, 1)
        s = jnp.where(col < tk_total, s, -1e30)
        row = base + jax.lax.broadcasted_iota(jnp.int32, v.shape, 0)
        v = jnp.where(row < tk_total, v, jnp.zeros_like(v))

    m_prev = m_sc[...]
    m_new = jnp.maximum(m_prev, jnp.max(s, axis=-1, keepdims=True))
    alpha = jnp.exp(m_prev - m_new)
    p = jnp.exp(s - m_new)                                  # f32, values in [0, 1]
    l_sc[...] = alpha * l_sc[...] + jnp.sum(p, axis=-1, keepdims=True)
    acc_sc[...] = alpha * acc_sc[...] + jnp.dot(
        p.astype(v.dtype), v, preferred_element_type=jnp.float32)   # bf16 MXU, f32 acc
    m_sc[...] = m_new

    @pl.when(kv == pl.num_programs(3) - 1)
    def _():
        inv_l = pl.reciprocal(l_sc[...], approx=False)      # exact; runs once per tile
        o_ref[...] = (acc_sc[...] * inv_l).astype(o_ref.dtype)


def pallas_attention(q_src, k_src, v_src, mask, *, h, d_k,
                     q_off=0, k_off=0, v_off=0,
                     q_tile=256, max_kv_tile=1024, out_dtype=None):
    """Flash-style attention per (batch, head, q-tile), reading head slices straight
    out of the projection output(s) and writing into a head-merged (B, Tq, h*d_k) slab.

    q_src: (B, Tq, Wq); k_src/v_src: (B, Tk, Wk/Wv). Head i of q/k/v lives at columns
    [(off + i) * d_k, (off + i + 1) * d_k) of its source array.
    mask: optional additive float mask (B, 1, Tq, Tk), broadcast over heads."""
    B, Tq, _ = q_src.shape
    Tk = k_src.shape[1]
    D = h * d_k
    out_dtype = out_dtype if out_dtype is not None else q_src.dtype
    # Head slices are addressed in the lane (last) dimension; keep them 128-aligned.
    # TODO(synk): add a (B, H, Tq, d_k) fallback layout for d_k not a multiple of 128.
    assert d_k % 128 == 0, "head dim must be a multiple of the 128-lane width"

    qt = min(q_tile, Tq)
    kv_tile = Tk if Tk <= max_kv_tile else max_kv_tile
    n_q = pl.cdiv(Tq, qt)
    n_kv = pl.cdiv(Tk, kv_tile)
    has_mask = mask is not None
    ragged_kv = (Tk % kv_tile) != 0

    kernel = partial(_flash_attn_kernel, has_mask=has_mask, kv_tile=kv_tile,
                     tk_total=Tk, ragged_kv=ragged_kv)

    in_specs = [
        pl.BlockSpec((None, qt, d_k), lambda b, i, qi, kv: (b, qi, q_off + i)),
        pl.BlockSpec((None, kv_tile, d_k), lambda b, i, qi, kv: (b, kv, k_off + i)),
        pl.BlockSpec((None, kv_tile, d_k), lambda b, i, qi, kv: (b, kv, v_off + i)),
    ]
    operands = [q_src, k_src, v_src]
    if has_mask:
        in_specs.append(
            pl.BlockSpec((None, None, qt, kv_tile), lambda b, i, qi, kv: (b, 0, qi, kv)))
        operands.append(mask)

    return pl.pallas_call(
        kernel,
        out_shape=jax.ShapeDtypeStruct((B, Tq, D), out_dtype),
        grid_spec=pltpu.PrefetchScalarGridSpec(
            num_scalar_prefetch=0,
            grid=(B, h, n_q, n_kv),
            in_specs=in_specs,
            out_specs=pl.BlockSpec((None, qt, d_k), lambda b, i, qi, kv: (b, qi, i)),
            scratch_shapes=[
                pltpu.VMEM((qt, 1), jnp.float32),      # running max
                pltpu.VMEM((qt, 1), jnp.float32),      # running denominator
                pltpu.VMEM((qt, d_k), jnp.float32),    # unnormalized context
            ],
        ),
        compiler_params=pltpu.CompilerParams(
            dimension_semantics=("parallel", "parallel", "parallel", "arbitrary"),
            vmem_limit_bytes=48 * 1024 * 1024,   # safe on v7x's 64 MiB; ample on v5e/v6e
        ),
    )(*operands)


# ------------------------------------------------------------------ module ---
class OnnxMultiHeadedAttentionPallas:
    """Mirrors OnnxMultiHeadedAttention.forward (espnet model_type).
    Math: bf16 MXU operands with f32 accumulation; f32 master weights kept for
    the reference."""

    def __init__(self, n_head, d_model, key, *, compute_dtype=jnp.bfloat16,
                 q_tile=256, max_kv_tile=1024, linear_tile_n=512):
        assert d_model % n_head == 0
        self.h = n_head
        self.d_k = d_model // n_head
        self.all_head_size = d_model
        self.compute_dtype = compute_dtype
        self.q_tile = q_tile
        self.max_kv_tile = max_kv_tile
        self.linear_tile_n = linear_tile_n

        ks = jax.random.split(key, 8)
        s = 1.0 / math.sqrt(d_model)

        def lin(kw, kb):
            # PyTorch nn.Linear layout is (d_out, d_in); pre-transpose once so the
            # kernels contract directly on the MXU (no in-kernel transpose).
            w = jax.random.uniform(kw, (d_model, d_model), jnp.float32, -s, s)
            b = jax.random.uniform(kb, (d_model,), jnp.float32, -s, s)
            return jnp.asarray(w.T), b

        # f32 master weights (used by the pure-JAX reference).
        self.wq_t, self.bq = lin(ks[0], ks[1])
        self.wk_t, self.bk = lin(ks[2], ks[3])
        self.wv_t, self.bv = lin(ks[4], ks[5])
        self.wo_t, self.bo = lin(ks[6], ks[7])

        # Kernel weights: 1/sqrt(d_k) folded into the q projection, bf16 weights
        # (biases stay f32 and are added after the f32 accumulation).
        scale = 1.0 / math.sqrt(self.d_k)
        cd = compute_dtype
        wq_s, bq_s = self.wq_t * scale, self.bq * scale
        self.k_wq, self.k_bq = wq_s.astype(cd), bq_s
        self.k_wk, self.k_bk = self.wk_t.astype(cd), self.bk
        self.k_wv, self.k_bv = self.wv_t.astype(cd), self.bv
        self.k_wo, self.k_bo = self.wo_t.astype(cd), self.bo
        # Fused QKV weight for the self-attention fast path (q scale pre-folded).
        self.k_wqkv = jnp.concatenate([wq_s, self.wk_t, self.wv_t], axis=1).astype(cd)
        self.k_bqkv = jnp.concatenate([bq_s, self.bk, self.bv])
        # Fused KV weight for the `key is value` (src-attention) fast path.
        self.k_wkv = jnp.concatenate([self.wk_t, self.wv_t], axis=1).astype(cd)
        self.k_bkv = jnp.concatenate([self.bk, self.bv])

    def _proj(self, x, w, b, out_dtype):
        n = x.shape[0] * x.shape[1]
        y = pallas_linear(x.reshape(n, x.shape[2]), w, b,
                          tile_n=self.linear_tile_n, out_dtype=out_dtype,
                          compute_dtype=self.compute_dtype)
        return y.reshape(x.shape[0], x.shape[1], -1)

    def __call__(self, query, key, value, mask=None):
        B, Tq, D = query.shape
        cd = self.compute_dtype

        if (query is key) and (key is value):
            # Self-attention: single fused QKV projection; heads sliced out of the
            # (B, Tq, 3D) bf16 slab by BlockSpec column offsets (q | k | v).
            qkv = self._proj(query, self.k_wqkv, self.k_bqkv, cd)
            q_src = k_src = v_src = qkv
            q_off, k_off, v_off = 0, self.h, 2 * self.h
        elif key is value:
            # espnet src-attention: fuse K/V projection over the encoder memory.
            q_src = self._proj(query, self.k_wq, self.k_bq, cd)
            kv = self._proj(key, self.k_wkv, self.k_bkv, cd)
            k_src = v_src = kv
            q_off, k_off, v_off = 0, 0, self.h
        else:
            q_src = self._proj(query, self.k_wq, self.k_bq, cd)
            k_src = self._proj(key, self.k_wk, self.k_bk, cd)
            v_src = self._proj(value, self.k_wv, self.k_bv, cd)
            q_off = k_off = v_off = 0

        # Optional additive mask, streamed bf16 (halves the dominant HBM stream);
        # mask=None skips the DMA and the add entirely.
        mask_cd = None if mask is None else mask.astype(cd)

        ctx = pallas_attention(q_src, k_src, v_src, mask_cd, h=self.h, d_k=self.d_k,
                               q_off=q_off, k_off=k_off, v_off=v_off,
                               q_tile=self.q_tile, max_kv_tile=self.max_kv_tile,
                               out_dtype=cd)

        # ctx is already head-merged (B, Tq, D): no transpose/reshape round trip.
        out = pallas_linear(ctx.reshape(B * Tq, D), self.k_wo, self.k_bo,
                            tile_n=self.linear_tile_n, out_dtype=query.dtype,
                            compute_dtype=cd)
        return out.reshape(B, Tq, D)


# ---------------------------------------------------------------- reference ---
def reference_forward(mod, query, key, value, mask=None):
    """Pure f32 JAX mirror of the PyTorch module."""
    def lin(x, w_t, b):
        return x @ w_t + b

    B, Tq, D = query.shape
    Tk = key.shape[1]

    def split(x, T):
        return x.reshape(B, T, mod.h, mod.d_k).transpose(0, 2, 1, 3)

    q = split(lin(query, mod.wq_t, mod.bq), Tq)
    k = split(lin(key, mod.wk_t, mod.bk), Tk)
    v = split(lin(value, mod.wv_t, mod.bv), Tk)
    scores = jnp.einsum("bhqd,bhkd->bhqk", q, k) / math.sqrt(mod.d_k)
    if mask is not None:
        scores = scores + mask
    attn = jax.nn.softmax(scores, axis=-1)
    ctx = jnp.einsum("bhqk,bhkd->bhqd", attn, v)
    ctx = ctx.transpose(0, 2, 1, 3).reshape(B, Tq, D)
    return lin(ctx, mod.wo_t, mod.bo)


if __name__ == "__main__":
    B, T, H, d_k = 2, 16, 2, 128
    D = H * d_k                                    # 256
    root = jax.random.PRNGKey(0)
    k_mod, k_x, k_q2, k_m2, k_q3, k_k3, k_v3 = jax.random.split(root, 7)

    mod = OnnxMultiHeadedAttentionPallas(H, D, k_mod)
    # bf16 MXU operands + bf16 intermediates -> relax tolerance vs f32 reference.
    TOL = dict(atol=1e-2, rtol=1e-2)

    # --- check 1: self-attention (fused QKV path), causal additive mask ------
    x = jax.random.normal(k_x, (B, T, D), jnp.float32)
    pos = jnp.arange(T)
    causal = (pos[None, :] <= pos[:, None]).astype(jnp.float32)
    mask_sa = jnp.broadcast_to(((1.0 - causal) * -1e9)[None, None], (B, 1, T, T))

    out_sa = jax.block_until_ready(mod(x, x, x, mask_sa))
    ref_sa = reference_forward(mod, x, x, x, mask_sa)
    assert jnp.allclose(out_sa, ref_sa, **TOL), "self-attn mismatch"

    # --- check 2: src-attention (key is value, fused KV path), padding mask --
    q2 = jax.random.normal(k_q2, (B, T, D), jnp.float32)
    mem = jax.random.normal(k_m2, (B, T, D), jnp.float32)
    lens = jnp.array([T, 10])
    valid = (jnp.arange(T)[None, :] < lens[:, None]).astype(jnp.float32)   # (B, Tk)
    mask_ca = jnp.broadcast_to(((1.0 - valid) * -1e9)[:, None, None, :], (B, 1, T, T))

    out_ca = jax.block_until_ready(mod(q2, mem, mem, mask_ca))
    ref_ca = reference_forward(mod, q2, mem, mem, mask_ca)
    assert jnp.allclose(out_ca, ref_ca, **TOL), "cross-attn (k is v) mismatch"

    # --- check 3: separate q/k/v, no mask, ragged last kv tile ---------------
    Tk3 = 384
    mod.max_kv_tile = 256                          # 384 % 256 != 0 -> ragged tail path
    q3 = jax.random.normal(k_q3, (1, T, D), jnp.float32)
    k3 = jax.random.normal(k_k3, (1, Tk3, D), jnp.float32)
    v3 = jax.random.normal(k_v3, (1, Tk3, D), jnp.float32)

    out_rg = jax.block_until_ready(mod(q3, k3, v3, None))
    ref_rg = reference_forward(mod, q3, k3, v3, None)
    assert jnp.allclose(out_rg, ref_rg, **TOL), "ragged-kv / no-mask mismatch"

    print("KERNEL_OK")
</pallas_src>

<mosaic_0001>
module attributes {stable_mosaic.version = 11 : i64} {
  func.func @_linear_kernel(%arg0: i32, %arg1: i32, %arg2: memref<32x256xf32, #tpu.memory_space<vmem>>, %arg3: memref<256x768xbf16, #tpu.memory_space<vmem>>, %arg4: memref<1x768xf32, #tpu.memory_space<vmem>>, %arg5: memref<32x768xbf16, #tpu.memory_space<vmem>>) attributes {dimension_semantics = [#tpu.dimension_semantics<parallel>, #tpu.dimension_semantics<parallel>], iteration_bounds = array<i64: 1, 1>, scalar_prefetch = 0 : i64, scratch_operands = 0 : i64, tpu.core_type = #tpu.core_type<tc>, window_params = [{transform_indices = @transform_0, window_bounds = array<i64: 32, 256>}, {transform_indices = @transform_1, window_bounds = array<i64: 256, 768>}, {transform_indices = @transform_2, window_bounds = array<i64: 1, 768>}, {transform_indices = @transform_3, window_bounds = array<i64: 32, 768>}]} {
    %c0 = arith.constant 0 : index
    %c0_0 = arith.constant 0 : index
    %0 = vector.load %arg2[%c0, %c0_0] : memref<32x256xf32, #tpu.memory_space<vmem>>, vector<32x256xf32>
    %1 = arith.truncf %0 : vector<32x256xf32> to vector<32x256xbf16>
    %c0_1 = arith.constant 0 : index
    %c0_2 = arith.constant 0 : index
    %2 = vector.load %arg3[%c0_1, %c0_2] : memref<256x768xbf16, #tpu.memory_space<vmem>>, vector<256x768xbf16>
    %cst = arith.constant dense<0.000000e+00> : vector<32x768xf32>
    %3 = tpu.matmul %1, %2, %cst {dimension_numbers = #tpu.dot_dimension_numbers<[1], [0], [0], [1], [0, 0, 1, 1], [], []>} : vector<32x256xbf16>, vector<256x768xbf16>, vector<32x768xf32> -> vector<32x768xf32>
    %c0_3 = arith.constant 0 : index
    %c0_4 = arith.constant 0 : index
    %4 = vector.load %arg4[%c0_3, %c0_4] : memref<1x768xf32, #tpu.memory_space<vmem>>, vector<1x768xf32>
    %5 = vector.broadcast %4 : vector<1x768xf32> to vector<32x768xf32>
    %6 = arith.addf %3, %5 : vector<32x768xf32>
    %7 = arith.truncf %6 : vector<32x768xf32> to vector<32x768xbf16>
    %c0_5 = arith.constant 0 : index
    %c0_6 = arith.constant 0 : index
    %8 = vector.load %arg5[%c0_5, %c0_6] : memref<32x768xbf16, #tpu.memory_space<vmem>>, vector<32x768xbf16>
    tpu.vector_store %arg5[%c0_5, %c0_6], %7 {strides = array<i32>} : memref<32x768xbf16, #tpu.memory_space<vmem>>, vector<32x768xbf16>,
    return
  }
  func.func @transform_0(%arg0: i32, %arg1: i32) -> (i32, i32) {
    %c0_i32 = arith.constant 0 : i32
    %c0_i32_0 = arith.constant 0 : i32
    return %arg1, %c0_i32 : i32, i32
  }
  func.func @transform_1(%arg0: i32, %arg1: i32) -> (i32, i32) {
    %c0_i32 = arith.constant 0 : i32
    %c0_i32_0 = arith.constant 0 : i32
    return %c0_i32, %arg0 : i32, i32
  }
  func.func @transform_2(%arg0: i32, %arg1: i32) -> (i32, i32) {
    %c0_i32 = arith.constant 0 : i32
    %c0_i32_0 = arith.constant 0 : i32
    return %c0_i32, %arg0 : i32, i32
  }
  func.func @transform_3(%arg0: i32, %arg1: i32) -> (i32, i32) {
    %c0_i32 = arith.constant 0 : i32
    return %arg1, %arg0 : i32, i32
  }
}

</mosaic_0001>

<llo_original>
// kernel: tpu_custom_call.1
$region0: #{tpu_custom_call.1}
  #allocation0 [shape = 'u32[]', space=smem, size = 0x4, offset = 0x4, fixed_abs, tag = 'smem constant byte address 0x4 - core index']
  #allocation1 [shape = 'u32[144,128]{1,0:T(1,128)}', space=vmem, size = 0x12000, scoped, tag = 'internal scratch']
  %s0 = inlined_call_operand.hbm [shape: f32[32,256], index: 0, kind: input, shape index: {}]
  %s1 = inlined_call_operand.hbm [shape: bf16[256,768], index: 1, kind: input, shape index: {}]
  %s2 = inlined_call_operand.hbm [shape: f32[1,768], index: 2, kind: input, shape index: {}]
  %s3 = inlined_call_operand.hbm [shape: bf16[32,768], index: 3, kind: output, shape index: {}]
  %s4 = sld [smem:[#allocation0]]
  $region34: #{tpu_custom_call.1} parent=0
    _
  %s6 = ssub.s32 1, %s4
  %s7 = scalar_select 0, %s6, %s4
  $region1: #{tpu_custom_call.1} parent=0
    #allocation2 [shape = 'u8[32768]{0}', space=vmem, size = 0x8000, scoped, tag = 'input window, operand 0, single buffered']
    #allocation3 [shape = 's32[1]{0}', space=sflag, size = 0x4, scoped, tag = 'scoped memory for tpu_custom_call.1']
    #allocation4 [shape = 's32[1]{0}', space=sflag, size = 0x4, scoped, tag = 'scoped memory for tpu_custom_call.1']
    #allocation5 [shape = 'u8[393216]{0}', space=vmem, size = 0x60000, scoped, tag = 'input window, operand 1, single buffered']
    #allocation6 [shape = 's32[1]{0}', space=sflag, size = 0x4, scoped, tag = 'scoped memory for tpu_custom_call.1']
    #allocation7 [shape = 'u8[3072]{0}', space=vmem, size = 0xc00, scoped, tag = 'input window, operand 2, single buffered']
    #allocation8 [shape = 'u8[49152]{0}', space=vmem, size = 0xc000, scoped, tag = 'output window, operand 0, single buffered']
    %8 = vsyncpa [#allocation3], 0
    %9 = vsyncpa [#allocation6], 0
    %10 = vsyncpa [#allocation4], 0
    // Predicated region
    $region2: #{tpu_custom_call.1} parent=1 // pred_check
      _
    $region3: #{tpu_custom_call.1} parent=1 // pred_check_branch
      %12 = sbr.rel (0) target = $region5
    $region4: #{tpu_custom_call.1} parent=1 // pred_region
      %s14 = ssub.s32 1024, 1024
      %15 = vsyncadd [#allocation3], %s14
      %s16 = sshll.u32 [#allocation2], 4
      %s17 = int_to_ptr.vmem [resolvable:$true] %s16
      %22 = dma.hbm_to_vmem [thread:$0]  %s0, 1024, %s17, [#allocation3], 256, 256, 16
    $region5: #{tpu_custom_call.1} parent=1 // pred_fallthru
      _
    // Predicated region
    $region6: #{tpu_custom_call.1} parent=1 // pred_check
      _
    $region7: #{tpu_custom_call.1} parent=1 // pred_check_branch
      %24 = sbr.rel (0) target = $region9
    $region8: #{tpu_custom_call.1} parent=1 // pred_region
      %s26 = ssub.s32 12288, 12288
      %27 = vsyncadd [#allocation6], %s26
      %s28 = sshll.u32 [#allocation5], 4
      %s29 = int_to_ptr.vmem [resolvable:$true] %s28
      %34 = dma.hbm_to_vmem [thread:$0]  %s1, 12288, %s29, [#allocation6], 384, 384, 24
    $region9: #{tpu_custom_call.1} parent=1 // pred_fallthru
      _
    // Predicated region
    $region10: #{tpu_custom_call.1} parent=1 // pred_check
      _
    $region11: #{tpu_custom_call.1} parent=1 // pred_check_branch
      %36 = sbr.rel (0) target = $region13
    $region12: #{tpu_custom_call.1} parent=1 // pred_region
      %s38 = ssub.s32 96, 96
      %39 = vsyncadd [#allocation6], %s38
      %s41 = sshll.u32 [#allocation7], 4
      %s42 = int_to_ptr.vmem [resolvable:$true] %s41
      %44 = dma.hbm_to_vmem [thread:$0]  %s2, 96, %s42, [#allocation6]
    $region13: #{tpu_custom_call.1} parent=1 // pred_fallthru
      _
    // Predicated region
    $region14: #{tpu_custom_call.1} parent=1 // pred_check
      _
    $region15: #{tpu_custom_call.1} parent=1 // pred_check_branch
      %46 = sbr.rel (0) target = $region17
    $region16: #{tpu_custom_call.1} parent=1 // pred_region
      %47 = dma.done [#allocation3], 1024
    $region17: #{tpu_custom_call.1} parent=1 // pred_fallthru
      _
    // Predicated region
    $region18: #{tpu_custom_call.1} parent=1 // pred_check
      _
    $region19: #{tpu_custom_call.1} parent=1 // pred_check_branch
      %49 = sbr.rel (0) target = $region21
    $region20: #{tpu_custom_call.1} parent=1 // pred_region
      %50 = dma.done [#allocation6], 12288
    $region21: #{tpu_custom_call.1} parent=1 // pred_fallthru
      _
    // Predicated region
    $region22: #{tpu_custom_call.1} parent=1 // pred_check
      _
    $region23: #{tpu_custom_call.1} parent=1 // pred_check_branch
      %52 = sbr.rel (0) target = $region25
    $region24: #{tpu_custom_call.1} parent=1 // pred_region
      %53 = dma.done [#allocation6], 96
    $region25: #{tpu_custom_call.1} parent=1 // pred_fallthru
      _
    %v54 = vld [vmem:[#allocation2] sm:$0xff]
    %v55 = vld [vmem:[#allocation2 + $0x8] sm:$0xff]
    %v56 = vld [vmem:[#allocation2 + $0x10] sm:$0xff]
    %v57 = vld [vmem:[#allocation2 + $0x18] sm:$0xff]
    %v58 = vld [vmem:[#allocation2 + $0x20] sm:$0xff]
    %v59 = vld [vmem:[#allocation2 + $0x28] sm:$0xff]
    %v60 = vld [vmem:[#allocation2 + $0x30] sm:$0xff]
    %v61 = vld [vmem:[#allocation2 + $0x38] sm:$0xff]
    %v62 = vpack.c.bf16 %v56, %v54
    %v63 = vpack.c.bf16 %v57, %v55
    %v64 = vpack.c.bf16 %v60, %v58
    %v65 = vpack.c.bf16 %v61, %v59
    %v66 = vld [vmem:[#allocation5] sm:$0xff]
    %v67 = vld [vmem:[#allocation5 + $0x8] sm:$0xff]
    %v68 = vld [vmem:[#allocation5 + $0x10] sm:$0xff]
    %v69 = vld [vmem:[#allocation5 + $0x18] sm:$0xff]
    %v70 = vld [vmem:[#allocation5 + $0x20] sm:$0xff]
    %v71 = vld [vmem:[#allocation5 + $0x28] sm:$0xff]
    %v72 = vld [vmem:[#allocation5 + $0x30] sm:$0xff]
    %v73 = vld [vmem:[#allocation5 + $0x38] sm:$0xff]
    %v74 = vld [vmem:[#allocation5 + $0x40] sm:$0xff]
    %v75 = vld [vmem:[#allocation5 + $0x48] sm:$0xff]
    %v76 = vld [vmem:[#allocation5 + $0x50] sm:$0xff]
    %v77 = vld [vmem:[#allocation5 + $0x58] sm:$0xff]
    %v78 = vld [vmem:[#allocation5 + $0x60] sm:$0xff]
    %v79 = vld [vmem:[#allocation5 + $0x68] sm:$0xff]
    %v80 = vld [vmem:[#allocation5 + $0x70] sm:$0xff]
    %v81 = vld [vmem:[#allocation5 + $0x78] sm:$0xff]
    %v82 = vld [vmem:[#allocation5 + $0x80] sm:$0xff]
    %v83 = vld [vmem:[#allocation5 + $0x88] sm:$0xff]
    %v84 = vld [vmem:[#allocation5 + $0x90] sm:$0xff]
    %v85 = vld [vmem:[#allocation5 + $0x98] sm:$0xff]
    %v86 = vld [vmem:[#allocation5 + $0xa0] sm:$0xff]
    %v87 = vld [vmem:[#allocation5 + $0xa8] sm:$0xff]
    %v88 = vld [vmem:[#allocation5 + $0xb0] sm:$0xff]
    %v89 = vld [vmem:[#allocation5 + $0xb8] sm:$0xff]
    %v90 = vld [vmem:[#allocation5 + $0xc0] sm:$0xff]
    %v91 = vld [vmem:[#allocation5 + $0xc8] sm:$0xff]
    %v92 = vld [vmem:[#allocation5 + $0xd0] sm:$0xff]
    %v93 = vld [vmem:[#allocation5 + $0xd8] sm:$0xff]
    %v94 = vld [vmem:[#allocation5 + $0xe0] sm:$0xff]
    %v95 = vld [vmem:[#allocation5 + $0xe8] sm:$0xff]
    %v96 = vld [vmem:[#allocation5 + $0xf0] sm:$0xff]
    %v97 = vld [vmem:[#allocation5 + $0xf8] sm:$0xff]
    %v98 = vld [vmem:[#allocation5 + $0x100] sm:$0xff]
    %v99 = vld [vmem:[#allocation5 + $0x108] sm:$0xff]
    %v100 = vld [vmem:[#allocation5 + $0x110] sm:$0xff]
    %v101 = vld [vmem:[#allocation5 + $0x118] sm:$0xff]
    %v102 = vld [vmem:[#allocation5 + $0x120] sm:$0xff]
    %v103 = vld [vmem:[#allocation5 + $0x128] sm:$0xff]
    %v104 = vld [vmem:[#allocation5 + $0x130] sm:$0xff]
    %v105 = vld [vmem:[#allocation5 + $0x138] sm:$0xff]
    %v106 = vld [vmem:[#allocation5 + $0x140] sm:$0xff]
    %v107 = vld [vmem:[#allocation5 + $0x148] sm:$0xff]
    %v108 = vld [vmem:[#allocation5 + $0x150] sm:$0xff]
    %v109 = vld [vmem:[#allocation5 + $0x158] sm:$0xff]
    %v110 = vld [vmem:[#allocation5 + $0x160] sm:$0xff]
    %v111 = vld [vmem:[#allocation5 + $0x168] sm:$0xff]
    %v112 = vld [vmem:[#allocation5 + $0x170] sm:$0xff]
    %v113 = vld [vmem:[#allocation5 + $0x178] sm:$0xff]
    %v114 = vld [vmem:[#allocation5 + $0x180] sm:$0xff]
    %v115 = vld [vmem:[#allocation5 + $0x188] sm:$0xff]
    %v116 = vld [vmem:[#allocation5 + $0x190] sm:$0xff]
    %v117 = vld [vmem:[#allocation5 + $0x198] sm:$0xff]
    %v118 = vld [vmem:[#allocation5 + $0x1a0] sm:$0xff]
    %v119 = vld [vmem:[#allocation5 + $0x1a8] sm:$0xff]
    %v120 = vld [vmem:[#allocation5 + $0x1b0] sm:$0xff]
    %v121 = vld [vmem:[#allocation5 + $0x1b8] sm:$0xff]
    %v122 = vld [vmem:[#allocation5 + $0x1c0] sm:$0xff]
    %v123 = vld [vmem:[#allocation5 + $0x1c8] sm:$0xff]
    %v124 = vld [vmem:[#allocation5 + $0x1d0] sm:$0xff]
    %v125 = vld [vmem:[#allocation5 + $0x1d8] sm:$0xff]
    %v126 = vld [vmem:[#allocation5 + $0x1e0] sm:$0xff]
    %v127 = vld [vmem:[#allocation5 + $0x1e8] sm:$0xff]
    %v128 = vld [vmem:[#allocation5 + $0x1f0] sm:$0xff]
    %v129 = vld [vmem:[#allocation5 + $0x1f8] sm:$0xff]
    %v130 = vld [vmem:[#allocation5 + $0x200] sm:$0xff]
    %v131 = vld [vmem:[#allocation5 + $0x208] sm:$0xff]
    %v132 = vld [vmem:[#allocation5 + $0x210] sm:$0xff]
    %v133 = vld [vmem:[#allocation5 + $0x218] sm:$0xff]
    %v134 = vld [vmem:[#allocation5 + $0x220] sm:$0xff]
    %v135 = vld [vmem:[#allocation5 + $0x228] sm:$0xff]
    %v136 = vld [vmem:[#allocation5 + $0x230] sm:$0xff]
    %v137 = vld [vmem:[#allocation5 + $0x238] sm:$0xff]
    %v138 = vld [vmem:[#allocation5 + $0x240] sm:$0xff]
    %v139 = vld [vmem:[#allocation5 + $0x248] sm:$0xff]
    %v140 = vld [vmem:[#allocation5 + $0x250] sm:$0xff]
    %v141 = vld [vmem:[#allocation5 + $0x258] sm:$0xff]
    %v142 = vld [vmem:[#allocation5 + $0x260] sm:$0xff]
    %v143 = vld [vmem:[#allocation5 + $0x268] sm:$0xff]
    %v144 = vld [vmem:[#allocation5 + $0x270] sm:$0xff]
    %v145 = vld [vmem:[#allocation5 + $0x278] sm:$0xff]
    %v146 = vld [vmem:[#allocation5 + $0x280] sm:$0xff]
    %v147 = vld [vmem:[#allocation5 + $0x288] sm:$0xff]
    %v148 = vld [vmem:[#allocation5 + $0x290] sm:$0xff]
    %v149 = vld [vmem:[#allocation5 + $0x298] sm:$0xff]
    %v150 = vld [vmem:[#allocation5 + $0x2a0] sm:$0xff]
    %v151 = vld [vmem:[#allocation5 + $0x2a8] sm:$0xff]
    %v152 = vld [vmem:[#allocation5 + $0x2b0] sm:$0xff]
    %v153 = vld [vmem:[#allocation5 + $0x2b8] sm:$0xff]
    %v154 = vld [vmem:[#allocation5 + $0x2c0] sm:$0xff]
    %v155 = vld [vmem:[#allocation5 + $0x2c8] sm:$0xff]
    %v156 = vld [vmem:[#allocation5 + $0x2d0] sm:$0xff]
    %v157 = vld [vmem:[#allocation5 + $0x2d8] sm:$0xff]
    %v158 = vld [vmem:[#allocation5 + $0x2e0] sm:$0xff]
    %v159 = vld [vmem:[#allocation5 + $0x2e8] sm:$0xff]
    %v160 = vld [vmem:[#allocation5 + $0x2f0] sm:$0xff]
    %v161 = vld [vmem:[#allocation5 + $0x2f8] sm:$0xff]
    %v162 = vld [vmem:[#allocation7] sm:$0x3f]
    %v164 = vlaneseq
    %v165 = vshrl.u32 %v164, 7
    %v166 = vsub.s32 0, %v165
    %v167 = vrot.slane %v162, %v166
    %v168 = vlaneseq
    %v169 = vshrl.u32 %v168, 7
    %v170 = vsub.s32 1, %v169
    %v171 = vrot.slane %v162, %v170
    %v172 = vlaneseq
    %v173 = vshrl.u32 %v172, 7
    %v174 = vsub.s32 2, %v173
    %v175 = vrot.slane %v162, %v174
    %v176 = vlaneseq
    %v177 = vshrl.u32 %v176, 7
    %v178 = vsub.s32 3, %v177
    %v179 = vrot.slane %v162, %v178
    %v180 = vlaneseq
    %v181 = vshrl.u32 %v180, 7
    %v182 = vsub.s32 4, %v181
    %v183 = vrot.slane %v162, %v182
    %v184 = vlaneseq
    %v185 = vshrl.u32 %v184, 7
    %v186 = vsub.s32 5, %v185
    %v187 = vrot.slane %v162, %v186
    %v290 = vunpack.c.l.b16 %v66
    %v291 = vunpack.c.h.b16 %v66
    %v292 = vunpack.c.l.b16 %v67
    %v293 = vunpack.c.h.b16 %v67
    %v294 = vunpack.c.l.b16 %v68
    %v295 = vunpack.c.h.b16 %v68
    %v296 = vunpack.c.l.b16 %v69
    %v297 = vunpack.c.h.b16 %v69
    %v298 = vunpack.c.l.b16 %v70
    %v299 = vunpack.c.h.b16 %v70
    %v300 = vunpack.c.l.b16 %v71
    %v301 = vunpack.c.h.b16 %v71
    %v302 = vunpack.c.l.b16 %v72
    %v303 = vunpack.c.h.b16 %v72
    %v304 = vunpack.c.l.b16 %v73
    %v305 = vunpack.c.h.b16 %v73
    %v306 = vunpack.c.l.b16 %v74
    %v307 = vunpack.c.h.b16 %v74
    %v308 = vunpack.c.l.b16 %v75
    %v309 = vunpack.c.h.b16 %v75
    %v310 = vunpack.c.l.b16 %v76
    %v311 = vunpack.c.h.b16 %v76
    %v312 = vunpack.c.l.b16 %v77
    %v313 = vunpack.c.h.b16 %v77
    %v314 = vunpack.c.l.b16 %v78
    %v315 = vunpack.c.h.b16 %v78
    %v316 = vunpack.c.l.b16 %v79
    %v317 = vunpack.c.h.b16 %v79
    %v318 = vunpack.c.l.b16 %v80
    %v319 = vunpack.c.h.b16 %v80
    %v320 = vunpack.c.l.b16 %v81
    %v321 = vunpack.c.h.b16 %v81
    %v322 = vunpack.c.l.b16 %v82
    %v323 = vunpack.c.h.b16 %v82
    %v324 = vunpack.c.l.b16 %v83
    %v325 = vunpack.c.h.b16 %v83
    %v326 = vunpack.c.l.b16 %v84
    %v327 = vunpack.c.h.b16 %v84
    %v328 = vunpack.c.l.b16 %v85
    %v329 = vunpack.c.h.b16 %v85
    %v330 = vunpack.c.l.b16 %v86
    %v331 = vunpack.c.h.b16 %v86
    %v332 = vunpack.c.l.b16 %v87
    %v333 = vunpack.c.h.b16 %v87
    %v334 = vunpack.c.l.b16 %v88
    %v335 = vunpack.c.h.b16 %v88
    %v336 = vunpack.c.l.b16 %v89
    %v337 = vunpack.c.h.b16 %v89
    %v338 = vunpack.c.l.b16 %v90
    %v339 = vunpack.c.h.b16 %v90
    %v340 = vunpack.c.l.b16 %v91
    %v341 = vunpack.c.h.b16 %v91
    %v342 = vunpack.c.l.b16 %v92
    %v343 = vunpack.c.h.b16 %v92
    %v344 = vunpack.c.l.b16 %v93
    %v345 = vunpack.c.h.b16 %v93
    %v346 = vunpack.c.l.b16 %v94
    %v347 = vunpack.c.h.b16 %v94
    %v348 = vunpack.c.l.b16 %v95
    %v349 = vunpack.c.h.b16 %v95
    %v350 = vunpack.c.l.b16 %v96
    %v351 = vunpack.c.h.b16 %v96
    %v352 = vunpack.c.l.b16 %v97
    %v353 = vunpack.c.h.b16 %v97
    %v354 = vunpack.c.l.b16 %v98
    %v355 = vunpack.c.h.b16 %v98
    %v356 = vunpack.c.l.b16 %v99
    %v357 = vunpack.c.h.b16 %v99
    %v358 = vunpack.c.l.b16 %v100
    %v359 = vunpack.c.h.b16 %v100
    %v360 = vunpack.c.l.b16 %v101
    %v361 = vunpack.c.h.b16 %v101
    %v362 = vunpack.c.l.b16 %v102
    %v363 = vunpack.c.h.b16 %v102
    %v364 = vunpack.c.l.b16 %v103
    %v365 = vunpack.c.h.b16 %v103
    %v366 = vunpack.c.l.b16 %v104
    %v367 = vunpack.c.h.b16 %v104
    %v368 = vunpack.c.l.b16 %v105
    %v369 = vunpack.c.h.b16 %v105
    %v370 = vunpack.c.l.b16 %v106
    %v371 = vunpack.c.h.b16 %v106
    %v372 = vunpack.c.l.b16 %v107
    %v373 = vunpack.c.h.b16 %v107
    %v374 = vunpack.c.l.b16 %v108
    %v375 = vunpack.c.h.b16 %v108
    %v376 = vunpack.c.l.b16 %v109
    %v377 = vunpack.c.h.b16 %v109
    %v378 = vunpack.c.l.b16 %v110
    %v379 = vunpack.c.h.b16 %v110
    %v380 = vunpack.c.l.b16 %v111
    %v381 = vunpack.c.h.b16 %v111
    %v382 = vunpack.c.l.b16 %v112
    %v383 = vunpack.c.h.b16 %v112
    %v384 = vunpack.c.l.b16 %v113
    %v385 = vunpack.c.h.b16 %v113
    %v386 = vunpack.c.l.b16 %v114
    %v387 = vunpack.c.h.b16 %v114
    %v388 = vunpack.c.l.b16 %v115
    %v389 = vunpack.c.h.b16 %v115
    %v390 = vunpack.c.l.b16 %v116
    %v391 = vunpack.c.h.b16 %v116
    %v392 = vunpack.c.l.b16 %v117
    %v393 = vunpack.c.h.b16 %v117
    %v394 = vunpack.c.l.b16 %v118
    %v395 = vunpack.c.h.b16 %v118
    %v396 = vunpack.c.l.b16 %v119
    %v397 = vunpack.c.h.b16 %v119
    %v398 = vunpack.c.l.b16 %v120
    %v399 = vunpack.c.h.b16 %v120
    %v400 = vunpack.c.l.b16 %v121
    %v401 = vunpack.c.h.b16 %v121
    %v402 = vunpack.c.l.b16 %v122
    %v403 = vunpack.c.h.b16 %v122
    %v404 = vunpack.c.l.b16 %v123
    %v405 = vunpack.c.h.b16 %v123
    %v406 = vunpack.c.l.b16 %v124
    %v407 = vunpack.c.h.b16 %v124
    %v408 = vunpack.c.l.b16 %v125
    %v409 = vunpack.c.h.b16 %v125
    %v410 = vunpack.c.l.b16 %v126
    %v411 = vunpack.c.h.b16 %v126
    %v412 = vunpack.c.l.b16 %v127
    %v413 = vunpack.c.h.b16 %v127
    %v414 = vunpack.c.l.b16 %v128
    %v415 = vunpack.c.h.b16 %v128
    %v416 = vunpack.c.l.b16 %v129
    %v417 = vunpack.c.h.b16 %v129
    %v418 = vunpack.c.l.b16 %v130
    %v419 = vunpack.c.h.b16 %v130
    %v420 = vunpack.c.l.b16 %v131
    %v421 = vunpack.c.h.b16 %v131
    %v422 = vunpack.c.l.b16 %v132
    %v423 = vunpack.c.h.b16 %v132
    %v424 = vunpack.c.l.b16 %v133
    %v425 = vunpack.c.h.b16 %v133
    %v426 = vunpack.c.l.b16 %v134
    %v427 = vunpack.c.h.b16 %v134
    %v428 = vunpack.c.l.b16 %v135
    %v429 = vunpack.c.h.b16 %v135
    %v430 = vunpack.c.l.b16 %v136
    %v431 = vunpack.c.h.b16 %v136
    %v432 = vunpack.c.l.b16 %v137
    %v433 = vunpack.c.h.b16 %v137
    %v434 = vunpack.c.l.b16 %v138
    %v435 = vunpack.c.h.b16 %v138
    %v436 = vunpack.c.l.b16 %v139
    %v437 = vunpack.c.h.b16 %v139
    %v438 = vunpack.c.l.b16 %v140
    %v439 = vunpack.c.h.b16 %v140
    %v440 = vunpack.c.l.b16 %v141
    %v441 = vunpack.c.h.b16 %v141
    %v442 = vunpack.c.l.b16 %v142
    %v443 = vunpack.c.h.b16 %v142
    %v444 = vunpack.c.l.b16 %v143
    %v445 = vunpack.c.h.b16 %v143
    %v446 = vunpack.c.l.b16 %v144
    %v447 = vunpack.c.h.b16 %v144
    %v448 = vunpack.c.l.b16 %v145
    %v449 = vunpack.c.h.b16 %v145
    %v450 = vunpack.c.l.b16 %v146
    %v451 = vunpack.c.h.b16 %v146
    %v452 = vunpack.c.l.b16 %v147
    %v453 = vunpack.c.h.b16 %v147
    %v454 = vunpack.c.l.b16 %v148
    %v455 = vunpack.c.h.b16 %v148
    %v456 = vunpack.c.l.b16 %v149
    %v457 = vunpack.c.h.b16 %v149
    %v458 = vunpack.c.l.b16 %v150
    %v459 = vunpack.c.h.b16 %v150
    %v460 = vunpack.c.l.b16 %v151
    %v461 = vunpack.c.h.b16 %v151
    %v462 = vunpack.c.l.b16 %v152
    %v463 = vunpack.c.h.b16 %v152
    %v464 = vunpack.c.l.b16 %v153
    %v465 = vunpack.c.h.b16 %v153
    %v466 = vunpack.c.l.b16 %v154
    %v467 = vunpack.c.h.b16 %v154
    %v468 = vunpack.c.l.b16 %v155
    %v469 = vunpack.c.h.b16 %v155
    %v470 = vunpack.c.l.b16 %v156
    %v471 = vunpack.c.h.b16 %v156
    %v472 = vunpack.c.l.b16 %v157
    %v473 = vunpack.c.h.b16 %v157
    %v474 = vunpack.c.l.b16 %v158
    %v475 = vunpack.c.h.b16 %v158
    %v476 = vunpack.c.l.b16 %v159
    %v477 = vunpack.c.h.b16 %v159
    %v478 = vunpack.c.l.b16 %v160
    %v479 = vunpack.c.h.b16 %v160
    %v480 = vunpack.c.l.b16 %v161
    %v481 = vunpack.c.h.b16 %v161
    %v482 = vpack.c.b16 %v296, %v290
    %v483 = vpack.c.b16 %v297, %v291
    %v484 = vpack.c.b16 %v298, %v292
    %v485 = vpack.c.b16 %v299, %v293
    %v486 = vpack.c.b16 %v300, %v294
    %v487 = vpack.c.b16 %v301, %v295
    %v488 = vpack.c.b16 %v308, %v302
    %v489 = vpack.c.b16 %v309, %v303
    %v490 = vpack.c.b16 %v310, %v304
    %v491 = vpack.c.b16 %v311, %v305
    %v492 = vpack.c.b16 %v312, %v306
    %v493 = vpack.c.b16 %v313, %v307
    %v494 = vpack.c.b16 %v320, %v314
    %v495 = vpack.c.b16 %v321, %v315
    %v496 = vpack.c.b16 %v322, %v316
    %v497 = vpack.c.b16 %v323, %v317
    %v498 = vpack.c.b16 %v324, %v318
    %v499 = vpack.c.b16 %v325, %v319
    %v500 = vpack.c.b16 %v332, %v326
    %v501 = vpack.c.b16 %v333, %v327
    %v502 = vpack.c.b16 %v334, %v328
    %v503 = vpack.c.b16 %v335, %v329
    %v504 = vpack.c.b16 %v336, %v330
    %v505 = vpack.c.b16 %v337, %v331
    %v506 = vpack.c.b16 %v344, %v338
    %v507 = vpack.c.b16 %v345, %v339
    %v508 = vpack.c.b16 %v346, %v340
    %v509 = vpack.c.b16 %v347, %v341
    %v510 = vpack.c.b16 %v348, %v342
    %v511 = vpack.c.b16 %v349, %v343
    %v512 = vpack.c.b16 %v356, %v350
    %v513 = vpack.c.b16 %v357, %v351
    %v514 = vpack.c.b16 %v358, %v352
    %v515 = vpack.c.b16 %v359, %v353
    %v516 = vpack.c.b16 %v360, %v354
    %v517 = vpack.c.b16 %v361, %v355
    %v518 = vpack.c.b16 %v368, %v362
    %v519 = vpack.c.b16 %v369, %v363
    %v520 = vpack.c.b16 %v370, %v364
    %v521 = vpack.c.b16 %v371, %v365
    %v522 = vpack.c.b16 %v372, %v366
    %v523 = vpack.c.b16 %v373, %v367
    %v524 = vpack.c.b16 %v380, %v374
    %v525 = vpack.c.b16 %v381, %v375
    %v526 = vpack.c.b16 %v382, %v376
    %v527 = vpack.c.b16 %v383, %v377
    %v528 = vpack.c.b16 %v384, %v378
    %v529 = vpack.c.b16 %v385, %v379
    %v530 = vpack.c.b16 %v392, %v386
    %v531 = vpack.c.b16 %v393, %v387
    %v532 = vpack.c.b16 %v394, %v388
    %v533 = vpack.c.b16 %v395, %v389
    %v534 = vpack.c.b16 %v396, %v390
    %v535 = vpack.c.b16 %v397, %v391
    %v536 = vpack.c.b16 %v404, %v398
    %v537 = vpack.c.b16 %v405, %v399
    %v538 = vpack.c.b16 %v406, %v400
    %v539 = vpack.c.b16 %v407, %v401
    %v540 = vpack.c.b16 %v408, %v402
    %v541 = vpack.c.b16 %v409, %v403
    %v542 = vpack.c.b16 %v416, %v410
    %v543 = vpack.c.b16 %v417, %v411
    %v544 = vpack.c.b16 %v418, %v412
    %v545 = vpack.c.b16 %v419, %v413
    %v546 = vpack.c.b16 %v420, %v414
    %v547 = vpack.c.b16 %v421, %v415
    %v548 = vpack.c.b16 %v428, %v422
    %v549 = vpack.c.b16 %v429, %v423
    %v550 = vpack.c.b16 %v430, %v424
    %v551 = vpack.c.b16 %v431, %v425
    %v552 = vpack.c.b16 %v432, %v426
    %v553 = vpack.c.b16 %v433, %v427
    %v554 = vpack.c.b16 %v440, %v434
    %v555 = vpack.c.b16 %v441, %v435
    %v556 = vpack.c.b16 %v442, %v436
    %v557 = vpack.c.b16 %v443, %v437
    %v558 = vpack.c.b16 %v444, %v438
    %v559 = vpack.c.b16 %v445, %v439
    %v560 = vpack.c.b16 %v452, %v446
    %v561 = vpack.c.b16 %v453, %v447
    %v562 = vpack.c.b16 %v454, %v448
    %v563 = vpack.c.b16 %v455, %v449
    %v564 = vpack.c.b16 %v456, %v450
    %v565 = vpack.c.b16 %v457, %v451
    %v566 = vpack.c.b16 %v464, %v458
    %v567 = vpack.c.b16 %v465, %v459
    %v568 = vpack.c.b16 %v466, %v460
    %v569 = vpack.c.b16 %v467, %v461
    %v570 = vpack.c.b16 %v468, %v462
    %v571 = vpack.c.b16 %v469, %v463
    %v572 = vpack.c.b16 %v476, %v470
    %v573 = vpack.c.b16 %v477, %v471
    %v574 = vpack.c.b16 %v478, %v472
    %v575 = vpack.c.b16 %v479, %v473
    %v576 = vpack.c.b16 %v480, %v474
    %v577 = vpack.c.b16 %v481, %v475
    %674 = vmatprep.subr.bf16.mxu0 %v525
    %675 = vmatpush1.bf16.msra.mxu0 %v524
    %676 = vmatprep.subr.bf16.mxu0 %v519
    %677 = vmatpush1.bf16.msra.mxu0 %v518
    %678 = vmatprep.subr.bf16.mxu0 %v513
    %679 = vmatpush1.bf16.msra.mxu0 %v512
    %680 = vmatprep.subr.bf16.mxu0 %v507
    %681 = vmatpush1.bf16.msra.mxu0 %v506
    %682 = vmatprep.subr.bf16.mxu0 %v501
    %683 = vmatpush1.bf16.msra.mxu0 %v500
    %684 = vmatprep.subr.bf16.mxu0 %v495
    %685 = vmatpush1.bf16.msra.mxu0 %v494
    %686 = vmatprep.subr.bf16.mxu0 %v489
    %687 = vmatpush1.bf16.msra.mxu0 %v488
    %688 = vmatprep.subr.bf16.mxu0 %v483
    %689 = vmatpush1.bf16.msra.mxu0 %v482
    %690 = vmatprep.subr.bf16.mxu0 %v573
    %691 = vmatpush2.bf16.msra.mxu0 %v572
    %692 = vmatprep.subr.bf16.mxu0 %v567
    %693 = vmatpush2.bf16.msra.mxu0 %v566
    %694 = vmatprep.subr.bf16.mxu0 %v561
    %695 = vmatpush2.bf16.msra.mxu0 %v560
    %696 = vmatprep.subr.bf16.mxu0 %v555
    %697 = vmatpush2.bf16.msra.mxu0 %v554
    %698 = vmatprep.subr.bf16.mxu0 %v549
    %699 = vmatpush2.bf16.msra.mxu0 %v548
    %700 = vmatprep.subr.bf16.mxu0 %v543
    %701 = vmatpush2.bf16.msra.mxu0 %v542
    %702 = vmatprep.subr.bf16.mxu0 %v537
    %703 = vmatpush2.bf16.msra.mxu0 %v536
    %704 = vmatprep.subr.bf16.mxu0 %v531
    %705 = vmatpush2.bf16.msra.mxu0 %v530
    %706 = vmatprep.mubr.bf16.mxu0 %v63
    %707 = vmatmul.mubr.bf16.gmra.mxu0 %v62
    %v708 = vpop.f32.mrf.mxu0
    %v709 = vadd.f32 %v167, %v708
    %v710 = vpop.f32.mrf.mxu0
    %v711 = vadd.f32 %v171, %v710
    %v712 = vpop.f32.mrf.mxu0
    %v713 = vadd.f32 %v167, %v712
    %v714 = vpop.f32.mrf.mxu0
    %v715 = vadd.f32 %v171, %v714
    %716 = vmatprep.mubr.bf16.mxu0 %v65
    %717 = vmatmul.mubr.bf16.gmra.mxu0 %v64
    %v718 = vpop.f32.mrf.mxu0
    %v719 = vadd.f32 %v167, %v718
    %v720 = vpop.f32.mrf.mxu0
    %v721 = vadd.f32 %v171, %v720
    %v722 = vpop.f32.mrf.mxu0
    %v723 = vadd.f32 %v167, %v722
    %v724 = vpop.f32.mrf.mxu0
    %v725 = vadd.f32 %v171, %v724
    %726 = vdwg.mxu0
    %727 = vmatprep.subr.bf16.mxu0 %v527
    %728 = vmatpush1.bf16.msra.mxu0 %v526
    %729 = vmatprep.subr.bf16.mxu0 %v521
    %730 = vmatpush1.bf16.msra.mxu0 %v520
    %731 = vmatprep.subr.bf16.mxu0 %v515
    %732 = vmatpush1.bf16.msra.mxu0 %v514
    %733 = vmatprep.subr.bf16.mxu0 %v509
    %734 = vmatpush1.bf16.msra.mxu0 %v508
    %735 = vmatprep.subr.bf16.mxu0 %v503
    %736 = vmatpush1.bf16.msra.mxu0 %v502
    %737 = vmatprep.subr.bf16.mxu0 %v497
    %738 = vmatpush1.bf16.msra.mxu0 %v496
    %739 = vmatprep.subr.bf16.mxu0 %v491
    %740 = vmatpush1.bf16.msra.mxu0 %v490
    %741 = vmatprep.subr.bf16.mxu0 %v485
    %742 = vmatpush1.bf16.msra.mxu0 %v484
    %743 = vmatprep.subr.bf16.mxu0 %v575
    %744 = vmatpush2.bf16.msra.mxu0 %v574
    %745 = vmatprep.subr.bf16.mxu0 %v569
    %746 = vmatpush2.bf16.msra.mxu0 %v568
    %747 = vmatprep.subr.bf16.mxu0 %v563
    %748 = vmatpush2.bf16.msra.mxu0 %v562
    %749 = vmatprep.subr.bf16.mxu0 %v557
    %750 = vmatpush2.bf16.msra.mxu0 %v556
    %751 = vmatprep.subr.bf16.mxu0 %v551
    %752 = vmatpush2.bf16.msra.mxu0 %v550
    %753 = vmatprep.subr.bf16.mxu0 %v545
    %754 = vmatpush2.bf16.msra.mxu0 %v544
    %755 = vmatprep.subr.bf16.mxu0 %v539
    %756 = vmatpush2.bf16.msra.mxu0 %v538
    %757 = vmatprep.subr.bf16.mxu0 %v533
    %758 = vmatpush2.bf16.msra.mxu0 %v532
    %759 = vmatprep.mubr.bf16.mxu0 %v63
    %760 = vmatmul.mubr.bf16.gmra.mxu0 %v62
    %v761 = vpop.f32.mrf.mxu0
    %v762 = vadd.f32 %v175, %v761
    %v763 = vpop.f32.mrf.mxu0
    %v764 = vadd.f32 %v179, %v763
    %v765 = vpop.f32.mrf.mxu0
    %v766 = vadd.f32 %v175, %v765
    %v767 = vpop.f32.mrf.mxu0
    %v768 = vadd.f32 %v179, %v767
    %769 = vmatprep.mubr.bf16.mxu0 %v65
    %770 = vmatmul.mubr.bf16.gmra.mxu0 %v64
    %v771 = vpop.f32.mrf.mxu0
    %v772 = vadd.f32 %v175, %v771
    %v773 = vpop.f32.mrf.mxu0
    %v774 = vadd.f32 %v179, %v773
    %v775 = vpop.f32.mrf.mxu0
    %v776 = vadd.f32 %v175, %v775
    %v777 = vpop.f32.mrf.mxu0
    %v778 = vadd.f32 %v179, %v777
    %779 = vdwg.mxu0
    %780 = vmatprep.subr.bf16.mxu0 %v529
    %781 = vmatpush1.bf16.msra.mxu0 %v528
    %782 = vmatprep.subr.bf16.mxu0 %v523
    %783 = vmatpush1.bf16.msra.mxu0 %v522
    %784 = vmatprep.subr.bf16.mxu0 %v517
    %785 = vmatpush1.bf16.msra.mxu0 %v516
    %786 = vmatprep.subr.bf16.mxu0 %v511
    %787 = vmatpush1.bf16.msra.mxu0 %v510
    %788 = vmatprep.subr.bf16.mxu0 %v505
    %789 = vmatpush1.bf16.msra.mxu0 %v504
    %790 = vmatprep.subr.bf16.mxu0 %v499
    %791 = vmatpush1.bf16.msra.mxu0 %v498
    %792 = vmatprep.subr.bf16.mxu0 %v493
    %793 = vmatpush1.bf16.msra.mxu0 %v492
    %794 = vmatprep.subr.bf16.mxu0 %v487
    %795 = vmatpush1.bf16.msra.mxu0 %v486
    %796 = vmatprep.subr.bf16.mxu0 %v577
    %797 = vmatpush2.bf16.msra.mxu0 %v576
    %798 = vmatprep.subr.bf16.mxu0 %v571
    %799 = vmatpush2.bf16.msra.mxu0 %v570
    %800 = vmatprep.subr.bf16.mxu0 %v565
    %801 = vmatpush2.bf16.msra.mxu0 %v564
    %802 = vmatprep.subr.bf16.mxu0 %v559
    %803 = vmatpush2.bf16.msra.mxu0 %v558
    %804 = vmatprep.subr.bf16.mxu0 %v553
    %805 = vmatpush2.bf16.msra.mxu0 %v552
    %806 = vmatprep.subr.bf16.mxu0 %v547
    %807 = vmatpush2.bf16.msra.mxu0 %v546
    %808 = vmatprep.subr.bf16.mxu0 %v541
    %809 = vmatpush2.bf16.msra.mxu0 %v540
    %810 = vmatprep.subr.bf16.mxu0 %v535
    %811 = vmatpush2.bf16.msra.mxu0 %v534
    %812 = vmatprep.mubr.bf16.mxu0 %v63
    %813 = vmatmul.mubr.bf16.gmra.mxu0 %v62
    %v814 = vpop.f32.mrf.mxu0
    %v815 = vadd.f32 %v183, %v814
    %v816 = vpop.f32.mrf.mxu0
    %v817 = vadd.f32 %v187, %v816
    %v818 = vpop.f32.mrf.mxu0
    %v819 = vadd.f32 %v183, %v818
    %v820 = vpop.f32.mrf.mxu0
    %v821 = vadd.f32 %v187, %v820
    %822 = vmatprep.mubr.bf16.mxu0 %v65
    %823 = vmatmul.mubr.bf16.gmra.mxu0 %v64
    %v824 = vpop.f32.mrf.mxu0
    %v825 = vadd.f32 %v183, %v824
    %v826 = vpop.f32.mrf.mxu0
    %v827 = vadd.f32 %v187, %v826
    %v828 = vpop.f32.mrf.mxu0
    %v829 = vadd.f32 %v183, %v828
    %v830 = vpop.f32.mrf.mxu0
    %v831 = vadd.f32 %v187, %v830
    %832 = vdwg.mxu0
    %v833 = vpack.c.bf16 %v713, %v709
    %v834 = vpack.c.bf16 %v715, %v711
    %v835 = vpack.c.bf16 %v766, %v762
    %v836 = vpack.c.bf16 %v768, %v764
    %v837 = vpack.c.bf16 %v819, %v815
    %v838 = vpack.c.bf16 %v821, %v817
    %v839 = vpack.c.bf16 %v723, %v719
    %v840 = vpack.c.bf16 %v725, %v721
    %v841 = vpack.c.bf16 %v776, %v772
    %v842 = vpack.c.bf16 %v778, %v774
    %v843 = vpack.c.bf16 %v829, %v825
    %v844 = vpack.c.bf16 %v831, %v827
    %v857 = vunpack.c.l.b16 %v833
    %v858 = vunpack.c.l.b16 %v834
    %v859 = vunpack.c.l.b16 %v835
    %v860 = vunpack.c.l.b16 %v836
    %v861 = vunpack.c.l.b16 %v837
    %v862 = vunpack.c.l.b16 %v838
    %v863 = vunpack.c.h.b16 %v833
    %v864 = vunpack.c.h.b16 %v834
    %v865 = vunpack.c.h.b16 %v835
    %v866 = vunpack.c.h.b16 %v836
    %v867 = vunpack.c.h.b16 %v837
    %v868 = vunpack.c.h.b16 %v838
    %v869 = vunpack.c.l.b16 %v839
    %v870 = vunpack.c.l.b16 %v840
    %v871 = vunpack.c.l.b16 %v841
    %v872 = vunpack.c.l.b16 %v842
    %v873 = vunpack.c.l.b16 %v843
    %v874 = vunpack.c.l.b16 %v844
    %v875 = vunpack.c.h.b16 %v839
    %v876 = vunpack.c.h.b16 %v840
    %v877 = vunpack.c.h.b16 %v841
    %v878 = vunpack.c.h.b16 %v842
    %v879 = vunpack.c.h.b16 %v843
    %v880 = vunpack.c.h.b16 %v844
    %v881 = vpack.c.b16 %v858, %v857
    %v882 = vpack.c.b16 %v860, %v859
    %v883 = vpack.c.b16 %v862, %v861
    %v884 = vpack.c.b16 %v864, %v863
    %v885 = vpack.c.b16 %v866, %v865
    %v886 = vpack.c.b16 %v868, %v867
    %v887 = vpack.c.b16 %v870, %v869
    %v888 = vpack.c.b16 %v872, %v871
    %v889 = vpack.c.b16 %v874, %v873
    %v890 = vpack.c.b16 %v876, %v875
    %v891 = vpack.c.b16 %v878, %v877
    %v892 = vpack.c.b16 %v880, %v879
    %905 = vst [vmem:[#allocation8] sm:$0xff] %v881
    %906 = vst [vmem:[#allocation8 + $0x8] sm:$0xff] %v882
    %907 = vst [vmem:[#allocation8 + $0x10] sm:$0xff] %v883
    %908 = vst [vmem:[#allocation8 + $0x18] sm:$0xff] %v884
    %909 = vst [vmem:[#allocation8 + $0x20] sm:$0xff] %v885
    %910 = vst [vmem:[#allocation8 + $0x28] sm:$0xff] %v886
    %911 = vst [vmem:[#allocation8 + $0x30] sm:$0xff] %v887
    %912 = vst [vmem:[#allocation8 + $0x38] sm:$0xff] %v888
    %913 = vst [vmem:[#allocation8 + $0x40] sm:$0xff] %v889
    %914 = vst [vmem:[#allocation8 + $0x48] sm:$0xff] %v890
    %915 = vst [vmem:[#allocation8 + $0x50] sm:$0xff] %v891
    %916 = vst [vmem:[#allocation8 + $0x58] sm:$0xff] %v892
    // Predicated region
    $region26: #{tpu_custom_call.1} parent=1 // pred_check
      _
    $region27: #{tpu_custom_call.1} parent=1 // pred_check_branch
      %918 = sbr.rel (0) target = $region29
    $region28: #{tpu_custom_call.1} parent=1 // pred_region
      %s920 = ssub.s32 1536, 1536
      %921 = vsyncadd [#allocation4], %s920
      %s922 = sshll.u32 [#allocation8], 4
      %s923 = int_to_ptr.vmem [resolvable:$true] %s922
      %928 = dma.vmem_to_hbm [thread:$0]  %s923, 1536, %s3, [#allocation4], 384, 384, 24
    $region29: #{tpu_custom_call.1} parent=1 // pred_fallthru
      _
    // Predicated region
    $region30: #{tpu_custom_call.1} parent=1 // pred_check
      _
    $region31: #{tpu_custom_call.1} parent=1 // pred_check_branch
      %930 = sbr.rel (0) target = $region33
    $region32: #{tpu_custom_call.1} parent=1 // pred_region
      %931 = dma.done [#allocation4], 1536
    $region33: #{tpu_custom_call.1} parent=1 // pred_fallthru
      _
    %932 = vsyncpa [#allocation3], 1
    %933 = vsyncpa [#allocation6], 1
    %934 = vsyncpa [#allocation4], 1

</llo_original>
